<compile_context>
chip_gen: v6e
topology: v6e:2x2x1
jax: 0.10.0
libtpu: 0.0.40
codegen_flags: <defaults>
</compile_context>

<pallas_src>
import functools

import jax
import jax.numpy as jnp
from jax.experimental import pallas as pl
from jax.experimental.pallas import tpu as pltpu


def _round_up(x, m):
    return (x + m - 1) // m * m


def _cdiv(a, b):
    return -(-a // b)


def _td_linear_kernel(x_ref, w_ref, b_ref, o_ref):
    """One (tm, tn) output tile: full-K dot, fused bias, single store."""
    x = x_ref[...].astype(jnp.bfloat16)  # in-kernel cast: no extra HBM pass
    acc = jnp.dot(x, w_ref[...], preferred_element_type=jnp.float32)
    o_ref[...] = (acc + b_ref[...]).astype(o_ref.dtype)


def _vmem_budget_bytes():
    """~half of physical VMEM: 64 MiB on v5e/v6e (128 MiB), 32 MiB on v7x (64 MiB)."""
    phys = 64 << 20  # conservative default (v7x-sized) if the query fails
    try:
        info = pltpu.get_tpu_info()
        phys = int(getattr(info, "vmem_capacity_bytes", phys)) or phys
    except Exception:
        pass
    return min(phys // 2, 96 << 20)


def _pick_tiles(M, K_pad, N_pad, x_bytes, out_bytes, budget):
    """Pick (tm, tn) for the full-K scheme; None if nothing fits VMEM."""
    m_need = _round_up(max(M, 1), 8)

    tn_cands = []
    for c in (N_pad, 1024, 512, 256, 128):
        if c <= N_pad and N_pad % c == 0 and c not in tn_cands:
            tn_cands.append(c)

    best_fallback = None
    for tn in tn_cands:
        # Double-buffered operands + in-kernel bf16 x copy + f32 accumulator.
        fixed = 2 * K_pad * tn * 2 + 2 * tn * 4                  # weight + bias
        per_row = (2 * K_pad * x_bytes + K_pad * 2               # x (2 bufs) + bf16 copy
                   + 2 * tn * out_bytes + tn * 4)                # out (2 bufs) + f32 acc
        avail = budget - fixed - (2 << 20)                       # headroom
        if avail < per_row * 8:
            continue
        max_tm = min(avail // per_row, 1024)
        max_tm -= max_tm % 8
        if max_tm < 8:
            continue
        if m_need <= max_tm:
            tm = m_need                        # one tile covers all rows, no waste
        else:
            cands = [c for c in (1024, 512, 384, 256, 192, 128) if c <= max_tm]
            if not cands:
                cands = [max_tm]
            # Minimize M padding; break ties with the larger tile.
            tm = min(cands, key=lambda c: (_round_up(M, c) - M, -c))
        if max_tm >= min(m_need, 128):
            return tm, tn
        if best_fallback is None or max_tm > best_fallback[2]:
            best_fallback = (tm, tn, max_tm)

    if best_fallback is not None:
        return best_fallback[0], best_fallback[1]
    return None


@functools.partial(jax.jit, static_argnames=("min_rows_for_pallas",))
def time_distributed_linear(x, w, b, *, min_rows_for_pallas=0):
    """TimeDistributed(nn.Linear): x (B, T, D_in), w (D_in, D_out), b (D_out,).

    Set min_rows_for_pallas ~256 in production to route tiny B*T to a plain
    XLA dot (MXU mostly idle there); default 0 always uses the Pallas kernel.
    """
    B, T, D_in = x.shape
    D_out = w.shape[1]
    M = B * T

    # --- TimeDistributed glue: x.contiguous().view(-1, D_in) ----------------
    x2 = x.reshape(M, D_in)

    K_pad = _round_up(D_in, 128)
    N_pad = _round_up(D_out, 128)
    x_bytes = jnp.dtype(x.dtype).itemsize
    out_bytes = x_bytes
    budget = _vmem_budget_bytes()

    tiles = None
    if M >= min_rows_for_pallas:
        tiles = _pick_tiles(M, K_pad, N_pad, x_bytes, out_bytes, budget)
    if tiles is None:
        # Tiny-M (or pathological-K) fallback: plain XLA dot is at least as fast.
        y2 = x2 @ w + b
        return y2.astype(x.dtype).reshape(B, T, D_out)

    tm, tn = tiles
    M_pad = _round_up(M, tm)
    gi, gj = M_pad // tm, N_pad // tn

    # v7x has 2 TensorCores: make sure the (parallel) grid has >= 2 blocks.
    if gi * gj == 1 and _round_up(M, 8) > 8:
        tm = _round_up(_cdiv(M, 2), 8)
        M_pad = 2 * tm
        gi = 2

    # --- Pad only when shapes are actually unaligned -------------------------
    if (M_pad, K_pad) != (M, D_in):
        x2 = jnp.pad(x2, ((0, M_pad - M), (0, K_pad - D_in)))
    wp = w
    if (K_pad, N_pad) != (D_in, D_out):
        wp = jnp.pad(wp, ((0, K_pad - D_in), (0, N_pad - D_out)))
    wp = wp.astype(jnp.bfloat16)          # weight is small: one-time cast is cheap
    bp = b.astype(jnp.float32)
    if N_pad != D_out:
        bp = jnp.pad(bp, (0, N_pad - D_out))
    bp = bp.reshape(1, N_pad)

    # Honest VMEM estimate for the chosen tiles (double-buffered operands plus
    # in-kernel bf16 x copy and f32 accumulator), capped by the chip budget.
    est = (2 * tm * K_pad * x_bytes + tm * K_pad * 2
           + 2 * K_pad * tn * 2 + 2 * tn * 4
           + 2 * tm * tn * out_bytes + tm * tn * 4)
    vmem_limit = int(min(budget, max(2 * est, 16 << 20)))

    y2 = pl.pallas_call(
        _td_linear_kernel,
        out_shape=jax.ShapeDtypeStruct((M_pad, N_pad), x.dtype),
        grid_spec=pltpu.PrefetchScalarGridSpec(
            num_scalar_prefetch=0,
            # Rows iterate innermost so the weight/bias panel (index ignores i)
            # is DMA'd once per output-column panel and stays VMEM-resident.
            grid=(gj, gi),
            in_specs=[
                pl.BlockSpec((tm, K_pad), lambda j, i: (i, 0)),   # activations
                pl.BlockSpec((K_pad, tn), lambda j, i: (0, j)),   # resident weights
                pl.BlockSpec((1, tn), lambda j, i: (0, j)),       # bias
            ],
            out_specs=pl.BlockSpec((tm, tn), lambda j, i: (i, j)),
        ),
        compiler_params=pltpu.CompilerParams(
            dimension_semantics=("parallel", "parallel"),
            vmem_limit_bytes=vmem_limit,
        ),
    )(x2, wp, bp)

    # --- Un-pad (only if padded) + TimeDistributed glue: view(B, T, -1) ------
    if (M_pad, N_pad) != (M, D_out):
        y2 = y2[:M, :D_out]
    return y2.reshape(B, T, D_out)

# TODO(synk): TimeDistributed wraps an arbitrary module in PyTorch; only the
# canonical nn.Linear payload is implemented as a Pallas kernel here.


if __name__ == "__main__":
    key = jax.random.PRNGKey(0)

    # --- Small demo shapes consistent with the forward: (batch, time, feat) --
    B, T = 2, 8
    D_IN, D_OUT = 256, 128

    kx, kw, kb = jax.random.split(key, 3)
    x = jax.random.normal(kx, (B, T, D_IN), dtype=jnp.float32)
    # Deterministic synthetic nn.Linear params (weight stored as (D_in, D_out)).
    w = jax.random.normal(kw, (D_IN, D_OUT), dtype=jnp.float32) * 0.02
    b = jax.random.normal(kb, (D_OUT,), dtype=jnp.float32) * 0.01

    y = time_distributed_linear(x, w, b)
    jax.block_until_ready(y)

    # Reference (pure JAX, f32). Kernel uses bf16 operands + f32 accumulation,
    # so tolerance is at bf16 level.
    y_ref = (x.reshape(-1, D_IN) @ w + b).reshape(B, T, -1)
    assert y.shape == (B, T, D_OUT), y.shape
    assert jnp.allclose(y, y_ref, atol=2e-2, rtol=2e-2), float(
        jnp.max(jnp.abs(y - y_ref))
    )

    # --- Second check: non-multiple dims exercise the padding path ----------
    B2, T2 = 3, 17
    D_IN2, D_OUT2 = 200, 96
    kx2, kw2, kb2 = jax.random.split(jax.random.PRNGKey(1), 3)
    x2 = jax.random.normal(kx2, (B2, T2, D_IN2), dtype=jnp.float32)
    w2 = jax.random.normal(kw2, (D_IN2, D_OUT2), dtype=jnp.float32) * 0.02
    b2 = jax.random.normal(kb2, (D_OUT2,), dtype=jnp.float32) * 0.01

    y_b = time_distributed_linear(x2, w2, b2)
    jax.block_until_ready(y_b)
    y_b_ref = (x2.reshape(-1, D_IN2) @ w2 + b2).reshape(B2, T2, -1)
    assert y_b.shape == (B2, T2, D_OUT2), y_b.shape
    assert jnp.allclose(y_b, y_b_ref, atol=2e-2, rtol=2e-2), float(
        jnp.max(jnp.abs(y_b - y_b_ref))
    )

    print("KERNEL_OK")
</pallas_src>

<mosaic_0001>
module attributes {stable_mosaic.version = 11 : i64} {
  func.func @_td_linear_kernel(%arg0: i32, %arg1: i32, %arg2: memref<8x256xf32, #tpu.memory_space<vmem>>, %arg3: memref<256x128xbf16, #tpu.memory_space<vmem>>, %arg4: memref<1x128xf32, #tpu.memory_space<vmem>>, %arg5: memref<8x128xf32, #tpu.memory_space<vmem>>) attributes {dimension_semantics = [#tpu.dimension_semantics<parallel>, #tpu.dimension_semantics<parallel>], iteration_bounds = array<i64: 1, 2>, scalar_prefetch = 0 : i64, scratch_operands = 0 : i64, tpu.core_type = #tpu.core_type<tc>, window_params = [{transform_indices = @transform_0, window_bounds = array<i64: 8, 256>}, {transform_indices = @transform_1, window_bounds = array<i64: 256, 128>}, {transform_indices = @transform_2, window_bounds = array<i64: 1, 128>}, {transform_indices = @transform_3, window_bounds = array<i64: 8, 128>}]} {
    %c0 = arith.constant 0 : index
    %c0_0 = arith.constant 0 : index
    %0 = vector.load %arg2[%c0, %c0_0] : memref<8x256xf32, #tpu.memory_space<vmem>>, vector<8x256xf32>
    %1 = arith.truncf %0 : vector<8x256xf32> to vector<8x256xbf16>
    %c0_1 = arith.constant 0 : index
    %c0_2 = arith.constant 0 : index
    %2 = vector.load %arg3[%c0_1, %c0_2] : memref<256x128xbf16, #tpu.memory_space<vmem>>, vector<256x128xbf16>
    %cst = arith.constant dense<0.000000e+00> : vector<8x128xf32>
    %3 = tpu.matmul %1, %2, %cst {dimension_numbers = #tpu.dot_dimension_numbers<[1], [0], [0], [1], [0, 0, 1, 1], [], []>} : vector<8x256xbf16>, vector<256x128xbf16>, vector<8x128xf32> -> vector<8x128xf32>
    %c0_3 = arith.constant 0 : index
    %c0_4 = arith.constant 0 : index
    %4 = vector.load %arg4[%c0_3, %c0_4] : memref<1x128xf32, #tpu.memory_space<vmem>>, vector<1x128xf32>
    %5 = vector.broadcast %4 : vector<1x128xf32> to vector<8x128xf32>
    %6 = arith.addf %3, %5 : vector<8x128xf32>
    %c0_5 = arith.constant 0 : index
    %c0_6 = arith.constant 0 : index
    %7 = vector.load %arg5[%c0_5, %c0_6] : memref<8x128xf32, #tpu.memory_space<vmem>>, vector<8x128xf32>
    tpu.vector_store %arg5[%c0_5, %c0_6], %6 {strides = array<i32>} : memref<8x128xf32, #tpu.memory_space<vmem>>, vector<8x128xf32>,
    return
  }
  func.func @transform_0(%arg0: i32, %arg1: i32) -> (i32, i32) {
    %c0_i32 = arith.constant 0 : i32
    %c0_i32_0 = arith.constant 0 : i32
    return %arg1, %c0_i32 : i32, i32
  }
  func.func @transform_1(%arg0: i32, %arg1: i32) -> (i32, i32) {
    %c0_i32 = arith.constant 0 : i32
    %c0_i32_0 = arith.constant 0 : i32
    return %c0_i32, %arg0 : i32, i32
  }
  func.func @transform_2(%arg0: i32, %arg1: i32) -> (i32, i32) {
    %c0_i32 = arith.constant 0 : i32
    %c0_i32_0 = arith.constant 0 : i32
    return %c0_i32, %arg0 : i32, i32
  }
  func.func @transform_3(%arg0: i32, %arg1: i32) -> (i32, i32) {
    %c0_i32 = arith.constant 0 : i32
    return %arg1, %arg0 : i32, i32
  }
}

</mosaic_0001>

<llo_original>
// kernel: time_distributed_linear.1
$region0: #{time_distributed_linear.1}
  #allocation0 [shape = 'u32[]', space=smem, size = 0x4, offset = 0x4, fixed_abs, tag = 'smem constant byte address 0x4 - core index']
  #allocation1 [shape = 'u32[144,128]{1,0:T(1,128)}', space=vmem, size = 0x12000, scoped, tag = 'internal scratch']
  %s0 = inlined_call_operand.vmem [shape: f32[16,256], index: 0, kind: input, shape index: {}]
  %s1 = inlined_call_operand.vmem [shape: bf16[256,128], index: 1, kind: input, shape index: {}]
  %s2 = inlined_call_operand.vmem [shape: f32[1,128], index: 2, kind: input, shape index: {}]
  %s3 = inlined_call_operand.hbm [shape: f32[16,128], index: 3, kind: output, shape index: {}]
  %s4 = sld [smem:[#allocation0]]
  $region45: #{time_distributed_linear.1} parent=0
    _
  %s6 = ssub.s32 1, %s4
  %s7 = scalar_select 0, %s6, %s4
  $region1: #{time_distributed_linear.1} parent=0
    #allocation2 [shape = 'u8[8192]{0}', space=vmem, size = 0x2000, scoped, tag = 'output window, operand 0']
    #allocation3 [shape = 's32[2]{0}', space=sflag, size = 0x8, scoped, tag = 'scoped memory for time_distributed_linear.1']
    %8 = vsyncpa [#allocation3], 0
    %s9 = scalar_lea.sflag [#allocation3], 1
    %10 = vsyncpa %s9, 0
    loop: start=0, step=1, limit=4
    $region2: #{time_distributed_linear.1} parent=1 // loop_pre_header
      _
    $region3: #{time_distributed_linear.1} parent=1 // loop_header
      %s12 = sphi 0, %s16
      %p13 = scmp.ge.s32.totalorder %s12, 4
      %s19 = sphi 0, %s31
      %s20 = sphi 0, %s27
      %s21 = sphi 0, %s19
      %s22 = sphi 0, %s20
      %s23 = sphi 0, %s21
      %s24 = sphi 0, %s22
      %s34 = sphi 0, %s36
      %s37 = sphi 0, %s34
      %s38 = sphi 0, %s37
      %s54 = sphi 0, %s38
      %s60 = sphi 0, %s62
      %s63 = sphi 0, %s60
      %s64 = sphi 0, %s63
      %s80 = sphi 0, %s64
      %s86 = sphi 0, %s88
      %s89 = sphi 0, %s86
      %s90 = sphi 0, %s89
      %s106 = sphi 0, %s90
      %s114 = sphi 0, %s116
      %s117 = sphi 0, %s114
      %s118 = sphi 0, %s117
      %s134 = sphi 0, %s118
    $region4: #{time_distributed_linear.1} parent=1 // loop_header_branch
      %15 = sbr.rel (%p13) target = $region8
    $region5: #{time_distributed_linear.1} parent=1 // loop_body
      %s17 = ssub.s32 %s12, 1
      %s18 = ssub.s32 %s12, 2
      %s25 = sadd.s32 1, %s20
      %p26 = scmp.ge.s32.totalorder %s25, 2
      %s27 = scalar_select %p26, 0, %s25
      %s28 = sadd.s32 1, %s19
      %s29 = scalar_select %p26, %s28, %s19
      %p30 = scmp.ge.s32.totalorder %s29, 1
      %s31 = scalar_select %p30, 0, %s29
      %s32 = ssub.s32 %s20, %s27
      %p33 = scmp.eq.s32.totalorder %s32, 0
      %s35 = sadd.s32 %s34, 1
      %s36 = scalar_select %p33, %s34, %s35
      %p39 = pneg %p33
      %p40 = scmp.eq.s32.totalorder %s12, 1
      %p41 = por %p39, %p40
      %p42 = scmp.ne.s32.totalorder %s34, %s37
      %p43 = scmp.eq.s32.totalorder %s12, 0
      %p44 = por %p42, %p43
      %p45 = scmp.ne.s32.totalorder %s34, %s37
      %p46 = scmp.eq.s32.totalorder %s17, 1
      %p47 = por %p45, %p46
      %p48 = scmp.ne.s32.totalorder %s37, %s38
      %p49 = scmp.eq.s32.totalorder %s17, 0
      %p50 = por %p48, %p49
      %p51 = scmp.ne.s32.totalorder %s37, %s38
      %p52 = scmp.eq.s32.totalorder %s18, 1
      %p53 = por %p51, %p52
      %p55 = scmp.ne.s32.totalorder %s38, %s54
      %p56 = scmp.eq.s32.totalorder %s18, 0
      %p57 = por %p55, %p56
      %s58 = ssub.s32 %s19, %s31
      %p59 = scmp.eq.s32.totalorder %s58, 0
      %s61 = sadd.s32 %s60, 1
      %s62 = scalar_select %p59, %s60, %s61
      %p65 = pneg %p59
      %p66 = scmp.eq.s32.totalorder %s12, 1
      %p67 = por %p65, %p66
      %p68 = scmp.ne.s32.totalorder %s60, %s63
      %p69 = scmp.eq.s32.totalorder %s12, 0
      %p70 = por %p68, %p69
      %p71 = scmp.ne.s32.totalorder %s60, %s63
      %p72 = scmp.eq.s32.totalorder %s17, 1
      %p73 = por %p71, %p72
      %p74 = scmp.ne.s32.totalorder %s63, %s64
      %p75 = scmp.eq.s32.totalorder %s17, 0
      %p76 = por %p74, %p75
      %p77 = scmp.ne.s32.totalorder %s63, %s64
      %p78 = scmp.eq.s32.totalorder %s18, 1
      %p79 = por %p77, %p78
      %p81 = scmp.ne.s32.totalorder %s64, %s80
      %p82 = scmp.eq.s32.totalorder %s18, 0
      %p83 = por %p81, %p82
      %s84 = ssub.s32 %s19, %s31
      %p85 = scmp.eq.s32.totalorder %s84, 0
      %s87 = sadd.s32 %s86, 1
      %s88 = scalar_select %p85, %s86, %s87
      %p91 = pneg %p85
      %p92 = scmp.eq.s32.totalorder %s12, 1
      %p93 = por %p91, %p92
      %p94 = scmp.ne.s32.totalorder %s86, %s89
      %p95 = scmp.eq.s32.totalorder %s12, 0
      %p96 = por %p94, %p95
      %p97 = scmp.ne.s32.totalorder %s86, %s89
      %p98 = scmp.eq.s32.totalorder %s17, 1
      %p99 = por %p97, %p98
      %p100 = scmp.ne.s32.totalorder %s89, %s90
      %p101 = scmp.eq.s32.totalorder %s17, 0
      %p102 = por %p100, %p101
      %p103 = scmp.ne.s32.totalorder %s89, %s90
      %p104 = scmp.eq.s32.totalorder %s18, 1
      %p105 = por %p103, %p104
      %p107 = scmp.ne.s32.totalorder %s90, %s106
      %p108 = scmp.eq.s32.totalorder %s18, 0
      %p109 = por %p107, %p108
      %s110 = ssub.s32 %s20, %s27
      %s111 = ssub.s32 %s19, %s31
      %s112 = sor.u32 %s110, %s111
      %p113 = scmp.eq.s32.totalorder %s112, 0
      %s115 = sadd.s32 %s114, 1
      %s116 = scalar_select %p113, %s114, %s115
      %p119 = pneg %p113
      %p120 = scmp.eq.s32.totalorder %s12, 1
      %p121 = por %p119, %p120
      %p122 = scmp.ne.s32.totalorder %s114, %s117
      %p123 = scmp.eq.s32.totalorder %s12, 0
      %p124 = por %p122, %p123
      %p125 = scmp.ne.s32.totalorder %s114, %s117
      %p126 = scmp.eq.s32.totalorder %s17, 1
      %p127 = por %p125, %p126
      %p128 = scmp.ne.s32.totalorder %s117, %s118
      %p129 = scmp.eq.s32.totalorder %s17, 0
      %p130 = por %p128, %p129
      %p131 = scmp.ne.s32.totalorder %s117, %s118
      %p132 = scmp.eq.s32.totalorder %s18, 1
      %p133 = por %p131, %p132
      %p135 = scmp.ne.s32.totalorder %s118, %s134
      %p136 = scmp.eq.s32.totalorder %s18, 0
      %p137 = por %p135, %p136
      %p138 = scmp.le.s32.totalorder 1, %s12
      %p139 = scmp.lt.s32.totalorder %s12, 3
      %p140 = pnand %p138, %p139
      %p141 = pneg %p140
      // Predicated region
      $region9: #{time_distributed_linear.1} parent=5 // pred_check
        _
      $region10: #{time_distributed_linear.1} parent=5 // pred_check_branch
        %143 = sbr.rel (%p140) target = $region12
      $region11: #{time_distributed_linear.1} parent=5 // pred_region
        %s144 = ssub.s32 %s12, 1
        // Predicated region
        $region13: #{time_distributed_linear.1} parent=11 // pred_check
          %p145 = pneg %p76
        $region14: #{time_distributed_linear.1} parent=11 // pred_check_branch
          %147 = sbr.rel (%p145) target = $region16
        $region15: #{time_distributed_linear.1} parent=11 // pred_region
          %p148 = scmp.lt.s32.totalorder %s21, 0
          %s149 = scalar_select %p148, %s21, 0
          %s150 = smul.addr %s149, 4
          %s151 = scalar_lea.vmem %s1, %s150
        $region16: #{time_distributed_linear.1} parent=11 // pred_fallthru
          _
        // Predicated region
        $region17: #{time_distributed_linear.1} parent=11 // pred_check
          %p152 = pneg %p102
        $region18: #{time_distributed_linear.1} parent=11 // pred_check_branch
          %154 = sbr.rel (%p152) target = $region20
        $region19: #{time_distributed_linear.1} parent=11 // pred_region
          %p155 = scmp.lt.s32.totalorder %s21, 0
          %s156 = scalar_select %p155, %s21, 0
          %s157 = scalar_lea.vmem %s2, %s156
        $region20: #{time_distributed_linear.1} parent=11 // pred_fallthru
          _
      $region12: #{time_distributed_linear.1} parent=5 // pred_fallthru
        _
      %p158 = scmp.lt.s32.totalorder %s12, 2
      // Predicated region
      $region21: #{time_distributed_linear.1} parent=5 // pred_check
        %p159 = pneg %p158
      $region22: #{time_distributed_linear.1} parent=5 // pred_check_branch
        %161 = sbr.rel (%p159) target = $region24
      $region23: #{time_distributed_linear.1} parent=5 // pred_region
        // Predicated region
        $region25: #{time_distributed_linear.1} parent=23 // pred_check
          %p162 = pneg %p44
        $region26: #{time_distributed_linear.1} parent=23 // pred_check_branch
          %164 = sbr.rel (%p162) target = $region28
        $region27: #{time_distributed_linear.1} parent=23 // pred_region
          %p165 = scmp.lt.s32.totalorder %s20, 1
          %s166 = scalar_select %p165, %s20, 1
          %s167 = smul.addr %s166, 2
          %s168 = smul.addr %s167, 8
          %s169 = scalar_lea.vmem %s0, %s168
        $region28: #{time_distributed_linear.1} parent=23 // pred_fallthru
          _
      $region24: #{time_distributed_linear.1} parent=5 // pred_fallthru
        _
      %p170 = scmp.le.s32.totalorder 1, %s12
      %p171 = scmp.lt.s32.totalorder %s12, 3
      %p172 = pnand %p170, %p171
      %p173 = pneg %p172
      // Predicated region
      $region29: #{time_distributed_linear.1} parent=5 // pred_check
        _
      $region30: #{time_distributed_linear.1} parent=5 // pred_check_branch
        %175 = sbr.rel (%p172) target = $region32
      $region31: #{time_distributed_linear.1} parent=5 // pred_region
        %s176 = ssub.s32 %s12, 1
        %p177 = scmp.lt.s32.totalorder %s22, 1
        %s178 = scalar_select %p177, %s22, 1
        %s179 = smul.addr %s178, 2
        %s180 = smul.addr %s179, 8
        %s181 = scalar_lea.vmem %s0, %s180
        %p182 = pneg %p50
        %p183 = pneg %p47
        %p184 = scmp.lt.s32.totalorder %s21, 0
        %s185 = scalar_select %p184, %s21, 0
        %s186 = smul.addr %s185, 4
        %s187 = scalar_lea.vmem %s1, %s186
        %p188 = pneg %p76
        %p189 = pneg %p73
        %p190 = scmp.lt.s32.totalorder %s21, 0
        %s191 = scalar_select %p190, %s21, 0
        %s192 = scalar_lea.vmem %s2, %s191
        %p193 = pneg %p102
        %p194 = pneg %p99
        %p195 = pneg %p130
        %p196 = pneg %p127
        %s197 = sand.u32 %s117, 1
        %s198 = scalar_lea.sflag [#allocation3], %s197
        %s199 = sand.u32 %s117, 1
        %s200 = smul.addr %s199, 8
        %s201 = scalar_lea.vmem [#allocation2], %s200
        %p202 = scmp.lt.s32.totalorder %s22, 1
        %s203 = scalar_select %p202, %s22, 1
        %s204 = smul.addr %s203, 2
        %s205 = smul.addr %s204, 8
        %s206 = scalar_lea.vmem %s0, %s205
        %p207 = scmp.lt.s32.totalorder %s21, 0
        %s208 = scalar_select %p207, %s21, 0
        %s209 = smul.addr %s208, 4
        %s210 = scalar_lea.vmem %s1, %s209
        %p211 = scmp.lt.s32.totalorder %s21, 0
        %s212 = scalar_select %p211, %s21, 0
        %s213 = scalar_lea.vmem %s2, %s212
        %v215 = vld [vmem:[%s206] sm:$0xff]
        %v216 = vld [vmem:[%s206 + $0x8] sm:$0xff]
        %v217 = vpack.c.bf16 %v215, %v215
        %v218 = vpack.c.bf16 %v216, %v216
        %v219 = vld [vmem:[%s210] sm:$0xf]
        %v220 = vld [vmem:[%s210 + $0x4] sm:$0xf]
        %v221 = vld [vmem:[%s210 + $0x8] sm:$0xf]
        %v222 = vld [vmem:[%s210 + $0xc] sm:$0xf]
        %v223 = vld [vmem:[%s210 + $0x10] sm:$0xf]
        %v224 = vld [vmem:[%s210 + $0x14] sm:$0xf]
        %v225 = vld [vmem:[%s210 + $0x18] sm:$0xf]
        %v226 = vld [vmem:[%s210 + $0x1c] sm:$0xf]
        %v227 = vld [vmem:[%s210 + $0x20] sm:$0xf]
        %v228 = vld [vmem:[%s210 + $0x24] sm:$0xf]
        %v229 = vld [vmem:[%s210 + $0x28] sm:$0xf]
        %v230 = vld [vmem:[%s210 + $0x2c] sm:$0xf]
        %v231 = vld [vmem:[%s210 + $0x30] sm:$0xf]
        %v232 = vld [vmem:[%s210 + $0x34] sm:$0xf]
        %v233 = vld [vmem:[%s210 + $0x38] sm:$0xf]
        %v234 = vld [vmem:[%s210 + $0x3c] sm:$0xf]
        %v235 = vld [vmem:[%s210 + $0x40] sm:$0xf]
        %v236 = vld [vmem:[%s210 + $0x44] sm:$0xf]
        %v237 = vld [vmem:[%s210 + $0x48] sm:$0xf]
        %v238 = vld [vmem:[%s210 + $0x4c] sm:$0xf]
        %v239 = vld [vmem:[%s210 + $0x50] sm:$0xf]
        %v240 = vld [vmem:[%s210 + $0x54] sm:$0xf]
        %v241 = vld [vmem:[%s210 + $0x58] sm:$0xf]
        %v242 = vld [vmem:[%s210 + $0x5c] sm:$0xf]
        %v243 = vld [vmem:[%s210 + $0x60] sm:$0xf]
        %v244 = vld [vmem:[%s210 + $0x64] sm:$0xf]
        %v245 = vld [vmem:[%s210 + $0x68] sm:$0xf]
        %v246 = vld [vmem:[%s210 + $0x6c] sm:$0xf]
        %v247 = vld [vmem:[%s210 + $0x70] sm:$0xf]
        %v248 = vld [vmem:[%s210 + $0x74] sm:$0xf]
        %v249 = vld [vmem:[%s210 + $0x78] sm:$0xf]
        %v250 = vld [vmem:[%s210 + $0x7c] sm:$0xf]
        %v251 = vld [vmem:[%s213] sm:$0x1]
        %v253 = vlaneseq
        %v254 = vshrl.u32 %v253, 7
        %v255 = vsub.s32 0, %v254
        %v256 = vrot.slane %v251, %v255
        %v290 = vunpack.c.l.b16 %v219
        %v291 = vunpack.c.l.b16 %v220
        %v292 = vunpack.c.l.b16 %v221
        %v293 = vunpack.c.l.b16 %v222
        %v294 = vunpack.c.l.b16 %v223
        %v295 = vunpack.c.l.b16 %v224
        %v296 = vunpack.c.l.b16 %v225
        %v297 = vunpack.c.l.b16 %v226
        %v298 = vunpack.c.l.b16 %v227
        %v299 = vunpack.c.l.b16 %v228
        %v300 = vunpack.c.l.b16 %v229
        %v301 = vunpack.c.l.b16 %v230
        %v302 = vunpack.c.l.b16 %v231
        %v303 = vunpack.c.l.b16 %v232
        %v304 = vunpack.c.l.b16 %v233
        %v305 = vunpack.c.l.b16 %v234
        %v306 = vunpack.c.l.b16 %v235
        %v307 = vunpack.c.l.b16 %v236
        %v308 = vunpack.c.l.b16 %v237
        %v309 = vunpack.c.l.b16 %v238
        %v310 = vunpack.c.l.b16 %v239
        %v311 = vunpack.c.l.b16 %v240
        %v312 = vunpack.c.l.b16 %v241
        %v313 = vunpack.c.l.b16 %v242
        %v314 = vunpack.c.l.b16 %v243
        %v315 = vunpack.c.l.b16 %v244
        %v316 = vunpack.c.l.b16 %v245
        %v317 = vunpack.c.l.b16 %v246
        %v318 = vunpack.c.l.b16 %v247
        %v319 = vunpack.c.l.b16 %v248
        %v320 = vunpack.c.l.b16 %v249
        %v321 = vunpack.c.l.b16 %v250
        %v322 = vpack.c.b16 %v291, %v290
        %v323 = vpack.c.b16 %v293, %v292
        %v324 = vpack.c.b16 %v295, %v294
        %v325 = vpack.c.b16 %v297, %v296
        %v326 = vpack.c.b16 %v299, %v298
        %v327 = vpack.c.b16 %v301, %v300
        %v328 = vpack.c.b16 %v303, %v302
        %v329 = vpack.c.b16 %v305, %v304
        %v330 = vpack.c.b16 %v307, %v306
        %v331 = vpack.c.b16 %v309, %v308
        %v332 = vpack.c.b16 %v311, %v310
        %v333 = vpack.c.b16 %v313, %v312
        %v334 = vpack.c.b16 %v315, %v314
        %v335 = vpack.c.b16 %v317, %v316
        %v336 = vpack.c.b16 %v319, %v318
        %v337 = vpack.c.b16 %v321, %v320
        %354 = vmatprep.subr.bf16.mxu0 0
        %355 = vmatpush1.bf16.msra.mxu0 %v329
        %356 = vmatprep.subr.bf16.mxu0 0
        %357 = vmatpush1.bf16.msra.mxu0 %v328
        %358 = vmatprep.subr.bf16.mxu0 0
        %359 = vmatpush1.bf16.msra.mxu0 %v327
        %360 = vmatprep.subr.bf16.mxu0 0
        %361 = vmatpush1.bf16.msra.mxu0 %v326
        %362 = vmatprep.subr.bf16.mxu0 0
        %363 = vmatpush1.bf16.msra.mxu0 %v325
        %364 = vmatprep.subr.bf16.mxu0 0
        %365 = vmatpush1.bf16.msra.mxu0 %v324
        %366 = vmatprep.subr.bf16.mxu0 0
        %367 = vmatpush1.bf16.msra.mxu0 %v323
        %368 = vmatprep.subr.bf16.mxu0 0
        %369 = vmatpush1.bf16.msra.mxu0 %v322
        %370 = vmatprep.subr.bf16.mxu0 0
        %371 = vmatpush2.bf16.msra.mxu0 %v337
        %372 = vmatprep.subr.bf16.mxu0 0
        %373 = vmatpush2.bf16.msra.mxu0 %v336
        %374 = vmatprep.subr.bf16.mxu0 0
        %375 = vmatpush2.bf16.msra.mxu0 %v335
        %376 = vmatprep.subr.bf16.mxu0 0
        %377 = vmatpush2.bf16.msra.mxu0 %v334
        %378 = vmatprep.subr.bf16.mxu0 0
        %379 = vmatpush2.bf16.msra.mxu0 %v333
        %380 = vmatprep.subr.bf16.mxu0 0
        %381 = vmatpush2.bf16.msra.mxu0 %v332
        %382 = vmatprep.subr.bf16.mxu0 0
        %383 = vmatpush2.bf16.msra.mxu0 %v331
        %384 = vmatprep.subr.bf16.mxu0 0
        %385 = vmatpush2.bf16.msra.mxu0 %v330
        %386 = vmatprep.mubr.bf16.mxu0 %v218
        %387 = vmatmul.mubr.bf16.gmra.mxu0 %v217
        %v388 = vpop.f32.mrf.mxu0
        %v389 = vadd.f32 %v256, %v388
        %v390 = vpop.f32.mrf.mxu0
        %v391 = vpop.f32.mrf.mxu0
        %v392 = vpop.f32.mrf.mxu0
        %393 = vdwg.mxu0
        %394 = vst [vmem:[%s201] sm:$0xff] %v389
        %s395 = sand.u32 %s117, 1
        %s396 = scalar_lea.sflag [#allocation3], %s395
        %s397 = sand.u32 %s117, 1
        %s398 = smul.addr %s397, 8
        %s399 = scalar_lea.vmem [#allocation2], %s398
        // Predicated region
        $region33: #{time_distributed_linear.1} parent=31 // pred_check
          %p400 = pneg %p127
        $region34: #{time_distributed_linear.1} parent=31 // pred_check_branch
          %402 = sbr.rel (%p400) target = $region36
        $region35: #{time_distributed_linear.1} parent=31 // pred_region
          %s404 = ssub.s32 128, 128
          %405 = vsyncadd %s396, %s404
          %s406 = sadd.s32 %s21, %s22
          %s407 = smul.addr %s406, 128
          %s408 = scalar_lea.hbm %s3, %s407
          %s410 = sshll.u32 %s399, 4
          %s411 = int_to_ptr.vmem [resolvable:$true] %s410
          %413 = dma.vmem_to_hbm [thread:$0]  %s411, 128, %s408, %s396
        $region36: #{time_distributed_linear.1} parent=31 // pred_fallthru
          _
      $region32: #{time_distributed_linear.1} parent=5 // pred_fallthru
        _
      %p414 = scmp.le.s32.totalorder 2, %s12
      // Predicated region
      $region37: #{time_distributed_linear.1} parent=5 // pred_check
        %p415 = pneg %p414
      $region38: #{time_distributed_linear.1} parent=5 // pred_check_branch
        %417 = sbr.rel (%p415) target = $region40
      $region39: #{time_distributed_linear.1} parent=5 // pred_region
        %s418 = ssub.s32 %s12, 2
        // Predicated region
        $region41: #{time_distributed_linear.1} parent=39 // pred_check
          %p419 = pneg %p133
        $region42: #{time_distributed_linear.1} parent=39 // pred_check_branch
          %421 = sbr.rel (%p419) target = $region44
        $region43: #{time_distributed_linear.1} parent=39 // pred_region
          %s422 = sand.u32 %s118, 1
          %s423 = scalar_lea.sflag [#allocation3], %s422
          %s424 = sand.u32 %s118, 1
          %s425 = smul.addr %s424, 8
          %s426 = scalar_lea.vmem [#allocation2], %s425
          %427 = dma.done %s423, 128
        $region44: #{time_distributed_linear.1} parent=39 // pred_fallthru
          _
      $region40: #{time_distributed_linear.1} parent=5 // pred_fallthru
        _
    $region6: #{time_distributed_linear.1} parent=1 // loop_footer
      %s16 = sadd.s32 1, %s12
    $region7: #{time_distributed_linear.1} parent=1 // loop_footer_branch
      %11 = sbr.rel target = $region3
    $region8: #{time_distributed_linear.1} parent=1 // loop_exit
      _
    %428 = vsyncpa [#allocation3], 1
    %s429 = scalar_lea.sflag [#allocation3], 1
    %430 = vsyncpa %s429, 1

</llo_original>
